<compile_context>
chip_gen: v7x
topology: tpu7x:2x2x1
jax: 0.10.0
libtpu: 0.0.40
codegen_flags: <defaults>
</compile_context>

<pallas_src>
import functools

import jax
import jax.numpy as jnp
from jax.experimental import pallas as pl
from jax.experimental.pallas import tpu as pltpu


def _input_padding_kernel(img_ref, delta_ref, out_ref, pad_ref, mask_ref, *,
                          u_pad, l_pad, mh0, mw0, img_h, img_w, out_w,
                          apply_sigmoid):
    """One batch block, flattened spatial layout.

    img_ref  : (bb, C, h*w)   raw image block (original dtype), lane-dense
    delta_ref: (3, H*W)       learnable perturbation (f32), lane-dense
    out_ref  : (bb, 3, H*W)   x_adv = zero_pad(image) + f(delta) * mask
    pad_ref  : (bb, C, H*W)   f32 scratch holding the zero-padded flattened image
    mask_ref : (1, H*W)       f32 scratch holding the padding mask
    """
    # --- f(delta) * mask ----------------------------------------------------
    delta = delta_ref[...]                                   # (3, H*W) f32
    if apply_sigmoid:                                        # non-'clip' models
        delta = jax.nn.sigmoid(delta)

    # Mask = 1 everywhere, 0 in the centered [mh0,mh0+h) x [mw0,mw0+w) window.
    # Built with static per-row slice stores (img_h tiny masked VMEM stores,
    # free filler while the kernel is HBM-write-bound); exact delta*mask math
    # (no jnp.where), so NaN/Inf propagation matches the PyTorch reference.
    mask_ref[...] = jnp.ones_like(mask_ref)
    zrow_m = jnp.zeros((1, img_w), jnp.float32)
    for r in range(mh0, mh0 + img_h):                        # static, unrolled
        mask_ref[:, r * out_w + mw0: r * out_w + mw0 + img_w] = zrow_m
    masked_delta = delta * mask_ref[...]                     # (3, H*W)

    # --- zero_pad(image), flattened ------------------------------------------
    # F.pad(image, (l_pad, r_pad, u_pad, d_pad)) in the flat domain: image row r
    # lands at flat offset (u_pad + r) * W + l_pad.
    pad_ref[...] = jnp.zeros_like(pad_ref)
    img = img_ref[...].astype(jnp.float32)                   # (bb, C, h*w)
    base = u_pad * out_w + l_pad
    for r in range(img_h):                                   # static, unrolled
        pad_ref[:, :, base + r * out_w: base + r * out_w + img_w] = (
            img[:, :, r * img_w:(r + 1) * img_w])

    # --- single fused, unmasked, full-tile store ------------------------------
    # Channel repeat (C=1 -> 3) handled by broadcasting; f32 accumulation, cast
    # only at the store (supports bf16 outputs).
    out_ref[...] = (pad_ref[...] + masked_delta[None]).astype(out_ref.dtype)


def input_padding_forward(image, delta, *, output_size=(3, 32, 32),
                          model_name="resnet", out_dtype=jnp.float32):
    """JAX/Pallas equivalent of InputPadding.forward(image, img_h=-1, img_w=-1)."""
    B, C, h, w = image.shape
    out_c, H, W = output_size

    # torch: image.repeat(1, 3-C+1, 1, 1); the subsequent (3,H,W) broadcast only
    # works for C in {1, 3}.
    if out_c != 3 or C not in (1, 3):
        raise ValueError(f"unsupported channels C={C}, out_c={out_c}; need C in {{1,3}}, out_c=3")

    HW = H * W
    hw = h * w
    u_pad = (H - h + 1) // 2                 # F.pad offsets
    l_pad = (W - w + 1) // 2
    mh0 = (H - h) // 2                       # mask-zero window offsets
    mw0 = (W - w) // 2
    apply_sigmoid = not (model_name[0:4] == "clip")

    # Lane-dense, free wrapper-side views (contiguous reshapes, no data movement).
    image_flat = image.reshape(B, C, hw)
    delta_flat = jnp.asarray(delta, jnp.float32).reshape(out_c, HW)

    # Batch tiling: keep each output block around ~2 MiB so double-buffered I/O
    # fits every generation's scoped VMEM default (v5e 16 MiB, v6e/v7x 32 MiB,
    # v7x 64 MiB physical) without needing vmem_limit_bytes; prefer an even step
    # count so dimension_semantics=("parallel",) feeds both v7x TensorCores.
    per_sample_bytes = out_c * HW * jnp.dtype(out_dtype).itemsize
    max_bb = max(1, (2 << 20) // per_sample_bytes)
    divisors = [d for d in range(1, B + 1) if B % d == 0 and d <= max_bb]
    even_nb = [d for d in divisors if (B // d) % 2 == 0]
    bb = max(even_nb) if even_nb else max(divisors)
    nb = B // bb

    kernel = functools.partial(
        _input_padding_kernel,
        u_pad=u_pad, l_pad=l_pad, mh0=mh0, mw0=mw0,
        img_h=h, img_w=w, out_w=W, apply_sigmoid=apply_sigmoid)

    out_flat = pl.pallas_call(
        kernel,
        out_shape=jax.ShapeDtypeStruct((B, out_c, HW), out_dtype),
        grid_spec=pltpu.PrefetchScalarGridSpec(
            num_scalar_prefetch=0,
            grid=(nb,),
            in_specs=[
                pl.BlockSpec((bb, C, hw), lambda i: (i, 0, 0)),     # image (flat)
                pl.BlockSpec((out_c, HW), lambda i: (0, 0)),        # delta (flat)
            ],
            out_specs=pl.BlockSpec((bb, out_c, HW), lambda i: (i, 0, 0)),
            scratch_shapes=[
                pltpu.VMEM((bb, C, HW), jnp.float32),   # zero-padded image
                pltpu.VMEM((1, HW), jnp.float32),       # padding mask
            ],
        ),
        compiler_params=pltpu.CompilerParams(
            dimension_semantics=("parallel",)),
    )(image_flat, delta_flat)

    return out_flat.reshape(B, out_c, H, W)


def _reference(image, delta, output_size=(3, 32, 32), model_name="resnet"):
    """Pure-JAX reference matching the PyTorch forward."""
    B, C, h, w = image.shape
    out_c, H, W = output_size
    image = jnp.tile(image.astype(jnp.float32), (1, 3 - C + 1, 1, 1))
    mask = jnp.ones((out_c, H, W), jnp.float32)
    mask = mask.at[:, (H - h) // 2:(H + h) // 2,
                      (W - w) // 2:(W + w) // 2].set(0.0)
    u, d = (H - h + 1) // 2, (H - h) // 2
    l, r = (W - w + 1) // 2, (W - w) // 2
    x = jnp.pad(image, ((0, 0), (0, 0), (u, d), (l, r)))
    md = delta * mask if model_name[0:4] == "clip" else jax.nn.sigmoid(delta) * mask
    return x + md[None]


if __name__ == "__main__":
    key = jax.random.PRNGKey(0)
    k_img, k_delta = jax.random.split(key)

    # Case 1: canonical config (img 3x16x16 -> out 3x32x32), sigmoid path, f32.
    image = jax.random.normal(k_img, (2, 3, 16, 16), jnp.float32)
    delta = 0.1 * jax.random.normal(k_delta, (3, 32, 32), jnp.float32)
    out = jax.block_until_ready(
        input_padding_forward(image, delta, output_size=(3, 32, 32),
                              model_name="resnet"))
    ref = _reference(image, delta, (3, 32, 32), "resnet")
    assert out.shape == (2, 3, 32, 32)
    assert jnp.allclose(out, ref, atol=1e-5, rtol=1e-5), "mismatch vs JAX reference"

    # Case 2: C=1 channel-repeat path and 'clip' (no sigmoid) path.
    image1 = jax.random.normal(k_img, (2, 1, 16, 16), jnp.float32)
    out1 = jax.block_until_ready(
        input_padding_forward(image1, delta, output_size=(3, 32, 32),
                              model_name="clip-vit"))
    ref1 = _reference(image1, delta, (3, 32, 32), "clip-vit")
    assert out1.shape == (2, 3, 32, 32)
    assert jnp.allclose(out1, ref1, atol=1e-5, rtol=1e-5), "mismatch (C=1/clip) vs ref"

    # Case 3: odd (H-h)/(W-w) pads (pad window shifted one row/col past the
    # mask-zero window) — exercises the fused-store odd-pad semantics.
    delta_odd = 0.1 * jax.random.normal(k_delta, (3, 35, 35), jnp.float32)
    out2 = jax.block_until_ready(
        input_padding_forward(image, delta_odd, output_size=(3, 35, 35),
                              model_name="resnet"))
    ref2 = _reference(image, delta_odd, (3, 35, 35), "resnet")
    assert out2.shape == (2, 3, 35, 35)
    assert jnp.allclose(out2, ref2, atol=1e-5, rtol=1e-5), "mismatch (odd pad) vs ref"

    print("KERNEL_OK")
</pallas_src>

<mosaic_0001>
module attributes {stable_mosaic.version = 11 : i64} {
  func.func @_input_padding_kernel(%arg0: i32, %arg1: memref<1x3x256xf32, #tpu.memory_space<vmem>>, %arg2: memref<3x1024xf32, #tpu.memory_space<vmem>>, %arg3: memref<1x3x1024xf32, #tpu.memory_space<vmem>>, %arg4: memref<1x3x1024xf32, #tpu.memory_space<vmem>>, %arg5: memref<1x1024xf32, #tpu.memory_space<vmem>>) attributes {dimension_semantics = [#tpu.dimension_semantics<parallel>], iteration_bounds = array<i64: 2>, scalar_prefetch = 0 : i64, scratch_operands = 2 : i64, tpu.core_type = #tpu.core_type<tc>, window_params = [{transform_indices = @transform_0, window_bounds = array<i64: 1, 3, 256>}, {pipeline_mode = #tpu.pipeline_mode<synchronous>, transform_indices = @transform_1, window_bounds = array<i64: 3, 1024>}, {transform_indices = @transform_2, window_bounds = array<i64: 1, 3, 1024>}]} {
    %c0 = arith.constant 0 : index
    %c0_0 = arith.constant 0 : index
    %0 = vector.load %arg2[%c0, %c0_0] : memref<3x1024xf32, #tpu.memory_space<vmem>>, vector<3x1024xf32>
    %1 = arith.negf %0 : vector<3x1024xf32>
    %2 = math.exp %1 : vector<3x1024xf32>
    %cst = arith.constant 1.000000e+00 : f32
    %3 = vector.broadcast %cst : f32 to vector<3x1024xf32>
    %4 = arith.addf %3, %2 : vector<3x1024xf32>
    %5 = arith.divf %3, %4 : vector<3x1024xf32>
    %cst_1 = arith.constant 1.000000e+00 : f32
    %6 = vector.broadcast %cst_1 : f32 to vector<1x1024xf32>
    %c0_2 = arith.constant 0 : index
    %c0_3 = arith.constant 0 : index
    %7 = vector.load %arg5[%c0_2, %c0_3] : memref<1x1024xf32, #tpu.memory_space<vmem>>, vector<1x1024xf32>
    tpu.vector_store %arg5[%c0_2, %c0_3], %6 {strides = array<i32>} : memref<1x1024xf32, #tpu.memory_space<vmem>>, vector<1x1024xf32>,
    %cst_4 = arith.constant 0.000000e+00 : f32
    %8 = vector.broadcast %cst_4 : f32 to vector<1x16xf32>
    %c0_5 = arith.constant 0 : index
    %c264 = arith.constant 264 : index
    %9 = vector.load %arg5[%c0_5, %c264] : memref<1x1024xf32, #tpu.memory_space<vmem>>, vector<1x16xf32>
    tpu.vector_store %arg5[%c0_5, %c264], %8 {strides = array<i32>} : memref<1x1024xf32, #tpu.memory_space<vmem>>, vector<1x16xf32>,
    %c0_6 = arith.constant 0 : index
    %c296 = arith.constant 296 : index
    %10 = vector.load %arg5[%c0_6, %c296] : memref<1x1024xf32, #tpu.memory_space<vmem>>, vector<1x16xf32>
    tpu.vector_store %arg5[%c0_6, %c296], %8 {strides = array<i32>} : memref<1x1024xf32, #tpu.memory_space<vmem>>, vector<1x16xf32>,
    %c0_7 = arith.constant 0 : index
    %c328 = arith.constant 328 : index
    %11 = vector.load %arg5[%c0_7, %c328] : memref<1x1024xf32, #tpu.memory_space<vmem>>, vector<1x16xf32>
    tpu.vector_store %arg5[%c0_7, %c328], %8 {strides = array<i32>} : memref<1x1024xf32, #tpu.memory_space<vmem>>, vector<1x16xf32>,
    %c0_8 = arith.constant 0 : index
    %c360 = arith.constant 360 : index
    %12 = vector.load %arg5[%c0_8, %c360] : memref<1x1024xf32, #tpu.memory_space<vmem>>, vector<1x16xf32>
    tpu.vector_store %arg5[%c0_8, %c360], %8 {strides = array<i32>} : memref<1x1024xf32, #tpu.memory_space<vmem>>, vector<1x16xf32>,
    %c0_9 = arith.constant 0 : index
    %c392 = arith.constant 392 : index
    %13 = vector.load %arg5[%c0_9, %c392] : memref<1x1024xf32, #tpu.memory_space<vmem>>, vector<1x16xf32>
    tpu.vector_store %arg5[%c0_9, %c392], %8 {strides = array<i32>} : memref<1x1024xf32, #tpu.memory_space<vmem>>, vector<1x16xf32>,
    %c0_10 = arith.constant 0 : index
    %c424 = arith.constant 424 : index
    %14 = vector.load %arg5[%c0_10, %c424] : memref<1x1024xf32, #tpu.memory_space<vmem>>, vector<1x16xf32>
    tpu.vector_store %arg5[%c0_10, %c424], %8 {strides = array<i32>} : memref<1x1024xf32, #tpu.memory_space<vmem>>, vector<1x16xf32>,
    %c0_11 = arith.constant 0 : index
    %c456 = arith.constant 456 : index
    %15 = vector.load %arg5[%c0_11, %c456] : memref<1x1024xf32, #tpu.memory_space<vmem>>, vector<1x16xf32>
    tpu.vector_store %arg5[%c0_11, %c456], %8 {strides = array<i32>} : memref<1x1024xf32, #tpu.memory_space<vmem>>, vector<1x16xf32>,
    %c0_12 = arith.constant 0 : index
    %c488 = arith.constant 488 : index
    %16 = vector.load %arg5[%c0_12, %c488] : memref<1x1024xf32, #tpu.memory_space<vmem>>, vector<1x16xf32>
    tpu.vector_store %arg5[%c0_12, %c488], %8 {strides = array<i32>} : memref<1x1024xf32, #tpu.memory_space<vmem>>, vector<1x16xf32>,
    %c0_13 = arith.constant 0 : index
    %c520 = arith.constant 520 : index
    %17 = vector.load %arg5[%c0_13, %c520] : memref<1x1024xf32, #tpu.memory_space<vmem>>, vector<1x16xf32>
    tpu.vector_store %arg5[%c0_13, %c520], %8 {strides = array<i32>} : memref<1x1024xf32, #tpu.memory_space<vmem>>, vector<1x16xf32>,
    %c0_14 = arith.constant 0 : index
    %c552 = arith.constant 552 : index
    %18 = vector.load %arg5[%c0_14, %c552] : memref<1x1024xf32, #tpu.memory_space<vmem>>, vector<1x16xf32>
    tpu.vector_store %arg5[%c0_14, %c552], %8 {strides = array<i32>} : memref<1x1024xf32, #tpu.memory_space<vmem>>, vector<1x16xf32>,
    %c0_15 = arith.constant 0 : index
    %c584 = arith.constant 584 : index
    %19 = vector.load %arg5[%c0_15, %c584] : memref<1x1024xf32, #tpu.memory_space<vmem>>, vector<1x16xf32>
    tpu.vector_store %arg5[%c0_15, %c584], %8 {strides = array<i32>} : memref<1x1024xf32, #tpu.memory_space<vmem>>, vector<1x16xf32>,
    %c0_16 = arith.constant 0 : index
    %c616 = arith.constant 616 : index
    %20 = vector.load %arg5[%c0_16, %c616] : memref<1x1024xf32, #tpu.memory_space<vmem>>, vector<1x16xf32>
    tpu.vector_store %arg5[%c0_16, %c616], %8 {strides = array<i32>} : memref<1x1024xf32, #tpu.memory_space<vmem>>, vector<1x16xf32>,
    %c0_17 = arith.constant 0 : index
    %c648 = arith.constant 648 : index
    %21 = vector.load %arg5[%c0_17, %c648] : memref<1x1024xf32, #tpu.memory_space<vmem>>, vector<1x16xf32>
    tpu.vector_store %arg5[%c0_17, %c648], %8 {strides = array<i32>} : memref<1x1024xf32, #tpu.memory_space<vmem>>, vector<1x16xf32>,
    %c0_18 = arith.constant 0 : index
    %c680 = arith.constant 680 : index
    %22 = vector.load %arg5[%c0_18, %c680] : memref<1x1024xf32, #tpu.memory_space<vmem>>, vector<1x16xf32>
    tpu.vector_store %arg5[%c0_18, %c680], %8 {strides = array<i32>} : memref<1x1024xf32, #tpu.memory_space<vmem>>, vector<1x16xf32>,
    %c0_19 = arith.constant 0 : index
    %c712 = arith.constant 712 : index
    %23 = vector.load %arg5[%c0_19, %c712] : memref<1x1024xf32, #tpu.memory_space<vmem>>, vector<1x16xf32>
    tpu.vector_store %arg5[%c0_19, %c712], %8 {strides = array<i32>} : memref<1x1024xf32, #tpu.memory_space<vmem>>, vector<1x16xf32>,
    %c0_20 = arith.constant 0 : index
    %c744 = arith.constant 744 : index
    %24 = vector.load %arg5[%c0_20, %c744] : memref<1x1024xf32, #tpu.memory_space<vmem>>, vector<1x16xf32>
    tpu.vector_store %arg5[%c0_20, %c744], %8 {strides = array<i32>} : memref<1x1024xf32, #tpu.memory_space<vmem>>, vector<1x16xf32>,
    %c0_21 = arith.constant 0 : index
    %c0_22 = arith.constant 0 : index
    %25 = vector.load %arg5[%c0_21, %c0_22] : memref<1x1024xf32, #tpu.memory_space<vmem>>, vector<1x1024xf32>
    %26 = vector.broadcast %25 : vector<1x1024xf32> to vector<3x1024xf32>
    %27 = arith.mulf %5, %26 : vector<3x1024xf32>
    %cst_23 = arith.constant 0.000000e+00 : f32
    %28 = vector.broadcast %cst_23 : f32 to vector<1x3x1024xf32>
    %c0_24 = arith.constant 0 : index
    %c0_25 = arith.constant 0 : index
    %c0_26 = arith.constant 0 : index
    %29 = vector.load %arg4[%c0_24, %c0_25, %c0_26] : memref<1x3x1024xf32, #tpu.memory_space<vmem>>, vector<1x3x1024xf32>
    tpu.vector_store %arg4[%c0_24, %c0_25, %c0_26], %28 {strides = array<i32>} : memref<1x3x1024xf32, #tpu.memory_space<vmem>>, vector<1x3x1024xf32>,
    %c0_27 = arith.constant 0 : index
    %c0_28 = arith.constant 0 : index
    %c0_29 = arith.constant 0 : index
    %30 = vector.load %arg1[%c0_27, %c0_28, %c0_29] : memref<1x3x256xf32, #tpu.memory_space<vmem>>, vector<1x3x256xf32>
    %31 = vector.extract_strided_slice %30 {offsets = [0, 0, 0], sizes = [1, 3, 16], strides = [1, 1, 1]} : vector<1x3x256xf32> to vector<1x3x16xf32>
    %c0_30 = arith.constant 0 : index
    %c0_31 = arith.constant 0 : index
    %c264_32 = arith.constant 264 : index
    %32 = vector.load %arg4[%c0_30, %c0_31, %c264_32] : memref<1x3x1024xf32, #tpu.memory_space<vmem>>, vector<1x3x16xf32>
    tpu.vector_store %arg4[%c0_30, %c0_31, %c264_32], %31 {strides = array<i32>} : memref<1x3x1024xf32, #tpu.memory_space<vmem>>, vector<1x3x16xf32>,
    %33 = vector.extract_strided_slice %30 {offsets = [0, 0, 16], sizes = [1, 3, 16], strides = [1, 1, 1]} : vector<1x3x256xf32> to vector<1x3x16xf32>
    %c0_33 = arith.constant 0 : index
    %c0_34 = arith.constant 0 : index
    %c296_35 = arith.constant 296 : index
    %34 = vector.load %arg4[%c0_33, %c0_34, %c296_35] : memref<1x3x1024xf32, #tpu.memory_space<vmem>>, vector<1x3x16xf32>
    tpu.vector_store %arg4[%c0_33, %c0_34, %c296_35], %33 {strides = array<i32>} : memref<1x3x1024xf32, #tpu.memory_space<vmem>>, vector<1x3x16xf32>,
    %35 = vector.extract_strided_slice %30 {offsets = [0, 0, 32], sizes = [1, 3, 16], strides = [1, 1, 1]} : vector<1x3x256xf32> to vector<1x3x16xf32>
    %c0_36 = arith.constant 0 : index
    %c0_37 = arith.constant 0 : index
    %c328_38 = arith.constant 328 : index
    %36 = vector.load %arg4[%c0_36, %c0_37, %c328_38] : memref<1x3x1024xf32, #tpu.memory_space<vmem>>, vector<1x3x16xf32>
    tpu.vector_store %arg4[%c0_36, %c0_37, %c328_38], %35 {strides = array<i32>} : memref<1x3x1024xf32, #tpu.memory_space<vmem>>, vector<1x3x16xf32>,
    %37 = vector.extract_strided_slice %30 {offsets = [0, 0, 48], sizes = [1, 3, 16], strides = [1, 1, 1]} : vector<1x3x256xf32> to vector<1x3x16xf32>
    %c0_39 = arith.constant 0 : index
    %c0_40 = arith.constant 0 : index
    %c360_41 = arith.constant 360 : index
    %38 = vector.load %arg4[%c0_39, %c0_40, %c360_41] : memref<1x3x1024xf32, #tpu.memory_space<vmem>>, vector<1x3x16xf32>
    tpu.vector_store %arg4[%c0_39, %c0_40, %c360_41], %37 {strides = array<i32>} : memref<1x3x1024xf32, #tpu.memory_space<vmem>>, vector<1x3x16xf32>,
    %39 = vector.extract_strided_slice %30 {offsets = [0, 0, 64], sizes = [1, 3, 16], strides = [1, 1, 1]} : vector<1x3x256xf32> to vector<1x3x16xf32>
    %c0_42 = arith.constant 0 : index
    %c0_43 = arith.constant 0 : index
    %c392_44 = arith.constant 392 : index
    %40 = vector.load %arg4[%c0_42, %c0_43, %c392_44] : memref<1x3x1024xf32, #tpu.memory_space<vmem>>, vector<1x3x16xf32>
    tpu.vector_store %arg4[%c0_42, %c0_43, %c392_44], %39 {strides = array<i32>} : memref<1x3x1024xf32, #tpu.memory_space<vmem>>, vector<1x3x16xf32>,
    %41 = vector.extract_strided_slice %30 {offsets = [0, 0, 80], sizes = [1, 3, 16], strides = [1, 1, 1]} : vector<1x3x256xf32> to vector<1x3x16xf32>
    %c0_45 = arith.constant 0 : index
    %c0_46 = arith.constant 0 : index
    %c424_47 = arith.constant 424 : index
    %42 = vector.load %arg4[%c0_45, %c0_46, %c424_47] : memref<1x3x1024xf32, #tpu.memory_space<vmem>>, vector<1x3x16xf32>
    tpu.vector_store %arg4[%c0_45, %c0_46, %c424_47], %41 {strides = array<i32>} : memref<1x3x1024xf32, #tpu.memory_space<vmem>>, vector<1x3x16xf32>,
    %43 = vector.extract_strided_slice %30 {offsets = [0, 0, 96], sizes = [1, 3, 16], strides = [1, 1, 1]} : vector<1x3x256xf32> to vector<1x3x16xf32>
    %c0_48 = arith.constant 0 : index
    %c0_49 = arith.constant 0 : index
    %c456_50 = arith.constant 456 : index
    %44 = vector.load %arg4[%c0_48, %c0_49, %c456_50] : memref<1x3x1024xf32, #tpu.memory_space<vmem>>, vector<1x3x16xf32>
    tpu.vector_store %arg4[%c0_48, %c0_49, %c456_50], %43 {strides = array<i32>} : memref<1x3x1024xf32, #tpu.memory_space<vmem>>, vector<1x3x16xf32>,
    %45 = vector.extract_strided_slice %30 {offsets = [0, 0, 112], sizes = [1, 3, 16], strides = [1, 1, 1]} : vector<1x3x256xf32> to vector<1x3x16xf32>
    %c0_51 = arith.constant 0 : index
    %c0_52 = arith.constant 0 : index
    %c488_53 = arith.constant 488 : index
    %46 = vector.load %arg4[%c0_51, %c0_52, %c488_53] : memref<1x3x1024xf32, #tpu.memory_space<vmem>>, vector<1x3x16xf32>
    tpu.vector_store %arg4[%c0_51, %c0_52, %c488_53], %45 {strides = array<i32>} : memref<1x3x1024xf32, #tpu.memory_space<vmem>>, vector<1x3x16xf32>,
    %47 = vector.extract_strided_slice %30 {offsets = [0, 0, 128], sizes = [1, 3, 16], strides = [1, 1, 1]} : vector<1x3x256xf32> to vector<1x3x16xf32>
    %c0_54 = arith.constant 0 : index
    %c0_55 = arith.constant 0 : index
    %c520_56 = arith.constant 520 : index
    %48 = vector.load %arg4[%c0_54, %c0_55, %c520_56] : memref<1x3x1024xf32, #tpu.memory_space<vmem>>, vector<1x3x16xf32>
    tpu.vector_store %arg4[%c0_54, %c0_55, %c520_56], %47 {strides = array<i32>} : memref<1x3x1024xf32, #tpu.memory_space<vmem>>, vector<1x3x16xf32>,
    %49 = vector.extract_strided_slice %30 {offsets = [0, 0, 144], sizes = [1, 3, 16], strides = [1, 1, 1]} : vector<1x3x256xf32> to vector<1x3x16xf32>
    %c0_57 = arith.constant 0 : index
    %c0_58 = arith.constant 0 : index
    %c552_59 = arith.constant 552 : index
    %50 = vector.load %arg4[%c0_57, %c0_58, %c552_59] : memref<1x3x1024xf32, #tpu.memory_space<vmem>>, vector<1x3x16xf32>
    tpu.vector_store %arg4[%c0_57, %c0_58, %c552_59], %49 {strides = array<i32>} : memref<1x3x1024xf32, #tpu.memory_space<vmem>>, vector<1x3x16xf32>,
    %51 = vector.extract_strided_slice %30 {offsets = [0, 0, 160], sizes = [1, 3, 16], strides = [1, 1, 1]} : vector<1x3x256xf32> to vector<1x3x16xf32>
    %c0_60 = arith.constant 0 : index
    %c0_61 = arith.constant 0 : index
    %c584_62 = arith.constant 584 : index
    %52 = vector.load %arg4[%c0_60, %c0_61, %c584_62] : memref<1x3x1024xf32, #tpu.memory_space<vmem>>, vector<1x3x16xf32>
    tpu.vector_store %arg4[%c0_60, %c0_61, %c584_62], %51 {strides = array<i32>} : memref<1x3x1024xf32, #tpu.memory_space<vmem>>, vector<1x3x16xf32>,
    %53 = vector.extract_strided_slice %30 {offsets = [0, 0, 176], sizes = [1, 3, 16], strides = [1, 1, 1]} : vector<1x3x256xf32> to vector<1x3x16xf32>
    %c0_63 = arith.constant 0 : index
    %c0_64 = arith.constant 0 : index
    %c616_65 = arith.constant 616 : index
    %54 = vector.load %arg4[%c0_63, %c0_64, %c616_65] : memref<1x3x1024xf32, #tpu.memory_space<vmem>>, vector<1x3x16xf32>
    tpu.vector_store %arg4[%c0_63, %c0_64, %c616_65], %53 {strides = array<i32>} : memref<1x3x1024xf32, #tpu.memory_space<vmem>>, vector<1x3x16xf32>,
    %55 = vector.extract_strided_slice %30 {offsets = [0, 0, 192], sizes = [1, 3, 16], strides = [1, 1, 1]} : vector<1x3x256xf32> to vector<1x3x16xf32>
    %c0_66 = arith.constant 0 : index
    %c0_67 = arith.constant 0 : index
    %c648_68 = arith.constant 648 : index
    %56 = vector.load %arg4[%c0_66, %c0_67, %c648_68] : memref<1x3x1024xf32, #tpu.memory_space<vmem>>, vector<1x3x16xf32>
    tpu.vector_store %arg4[%c0_66, %c0_67, %c648_68], %55 {strides = array<i32>} : memref<1x3x1024xf32, #tpu.memory_space<vmem>>, vector<1x3x16xf32>,
    %57 = vector.extract_strided_slice %30 {offsets = [0, 0, 208], sizes = [1, 3, 16], strides = [1, 1, 1]} : vector<1x3x256xf32> to vector<1x3x16xf32>
    %c0_69 = arith.constant 0 : index
    %c0_70 = arith.constant 0 : index
    %c680_71 = arith.constant 680 : index
    %58 = vector.load %arg4[%c0_69, %c0_70, %c680_71] : memref<1x3x1024xf32, #tpu.memory_space<vmem>>, vector<1x3x16xf32>
    tpu.vector_store %arg4[%c0_69, %c0_70, %c680_71], %57 {strides = array<i32>} : memref<1x3x1024xf32, #tpu.memory_space<vmem>>, vector<1x3x16xf32>,
    %59 = vector.extract_strided_slice %30 {offsets = [0, 0, 224], sizes = [1, 3, 16], strides = [1, 1, 1]} : vector<1x3x256xf32> to vector<1x3x16xf32>
    %c0_72 = arith.constant 0 : index
    %c0_73 = arith.constant 0 : index
    %c712_74 = arith.constant 712 : index
    %60 = vector.load %arg4[%c0_72, %c0_73, %c712_74] : memref<1x3x1024xf32, #tpu.memory_space<vmem>>, vector<1x3x16xf32>
    tpu.vector_store %arg4[%c0_72, %c0_73, %c712_74], %59 {strides = array<i32>} : memref<1x3x1024xf32, #tpu.memory_space<vmem>>, vector<1x3x16xf32>,
    %61 = vector.extract_strided_slice %30 {offsets = [0, 0, 240], sizes = [1, 3, 16], strides = [1, 1, 1]} : vector<1x3x256xf32> to vector<1x3x16xf32>
    %c0_75 = arith.constant 0 : index
    %c0_76 = arith.constant 0 : index
    %c744_77 = arith.constant 744 : index
    %62 = vector.load %arg4[%c0_75, %c0_76, %c744_77] : memref<1x3x1024xf32, #tpu.memory_space<vmem>>, vector<1x3x16xf32>
    tpu.vector_store %arg4[%c0_75, %c0_76, %c744_77], %61 {strides = array<i32>} : memref<1x3x1024xf32, #tpu.memory_space<vmem>>, vector<1x3x16xf32>,
    %c0_78 = arith.constant 0 : index
    %c0_79 = arith.constant 0 : index
    %c0_80 = arith.constant 0 : index
    %63 = vector.load %arg4[%c0_78, %c0_79, %c0_80] : memref<1x3x1024xf32, #tpu.memory_space<vmem>>, vector<1x3x1024xf32>
    %64 = vector.shape_cast %27 : vector<3x1024xf32> to vector<1x3x1024xf32>
    %65 = arith.addf %63, %64 : vector<1x3x1024xf32>
    %c0_81 = arith.constant 0 : index
    %c0_82 = arith.constant 0 : index
    %c0_83 = arith.constant 0 : index
    %66 = vector.load %arg3[%c0_81, %c0_82, %c0_83] : memref<1x3x1024xf32, #tpu.memory_space<vmem>>, vector<1x3x1024xf32>
    tpu.vector_store %arg3[%c0_81, %c0_82, %c0_83], %65 {strides = array<i32>} : memref<1x3x1024xf32, #tpu.memory_space<vmem>>, vector<1x3x1024xf32>,
    return
  }
  func.func @transform_0(%arg0: i32) -> (i32, i32, i32) {
    %c0_i32 = arith.constant 0 : i32
    %c0_i32_0 = arith.constant 0 : i32
    %c0_i32_1 = arith.constant 0 : i32
    return %arg0, %c0_i32, %c0_i32_0 : i32, i32, i32
  }
  func.func @transform_1(%arg0: i32) -> (i32, i32) {
    %c0_i32 = arith.constant 0 : i32
    %c0_i32_0 = arith.constant 0 : i32
    %c0_i32_1 = arith.constant 0 : i32
    return %c0_i32, %c0_i32_0 : i32, i32
  }
  func.func @transform_2(%arg0: i32) -> (i32, i32, i32) {
    %c0_i32 = arith.constant 0 : i32
    %c0_i32_0 = arith.constant 0 : i32
    %c0_i32_1 = arith.constant 0 : i32
    return %arg0, %c0_i32, %c0_i32_0 : i32, i32, i32
  }
}

</mosaic_0001>

<llo_original>
// kernel: tpu_custom_call.1
$region0: #{tpu_custom_call.1}
  #allocation0 [shape = 'u32[]', space=smem, size = 0x4, offset = 0x4, fixed_abs, tag = 'smem constant byte address 0x4 - core index']
  #allocation1 [shape = 'u32[144,128]{1,0:T(1,128)}', space=vmem, size = 0x12000, scoped, tag = 'internal scratch']
  #allocation2 [shape = 'f32[1,3,1024]{2,1,0:T(4,128)}', space=vmem, size = 0x4000, scoped, tag = 'scratch operand']
  #allocation3 [shape = 'f32[1,1024]{1,0:T(1,128)}', space=vmem, size = 0x1000, scoped, tag = 'scratch operand']
  %s0 = inlined_call_operand.vmem [shape: f32[2,3,256], index: 0, kind: input, shape index: {}]
  %s1 = inlined_call_operand.hbm [shape: f32[3,1024], index: 1, kind: input, shape index: {}]
  %s2 = inlined_call_operand.vmem [shape: f32[2,3,1024], index: 2, kind: output, shape index: {}]
  %s3 = sld [smem:[#allocation0]]
  $region45: #{tpu_custom_call.1} parent=0
    _
  %s5 = ssub.s32 1, %s3
  %s6 = scalar_select 0, %s5, %s3
  $region1: #{tpu_custom_call.1} parent=0
    #allocation4 [shape = 'u8[16384]{0}', space=vmem, size = 0x4000, scoped, tag = 'input window, operand 1, single buffered']
    #allocation5 [shape = 's32[2]{0}', space=sflag, size = 0x8, scoped, tag = 'scoped memory for tpu_custom_call.1']
    %7 = vsyncpa [#allocation5], 0
    loop: start=0, step=1, limit=4
    $region2: #{tpu_custom_call.1} parent=1 // loop_pre_header
      _
    $region3: #{tpu_custom_call.1} parent=1 // loop_header
      %s9 = sphi 0, %s13
      %p10 = scmp.ge.s32.totalorder %s9, 4
      %s19 = sphi 0, %s21
      %s22 = sphi 0, %s19
      %s23 = sphi 0, %s22
      %s39 = sphi 0, %s23
      %s43 = sphi 0, %s43
      %s45 = sphi 0, %s43
      %s46 = sphi 0, %s45
      %s60 = sphi 0, %s46
      %s66 = sphi 0, %s68
      %s69 = sphi 0, %s66
      %s70 = sphi 0, %s69
      %s86 = sphi 0, %s70
    $region4: #{tpu_custom_call.1} parent=1 // loop_header_branch
      %12 = sbr.rel (%p10) target = $region8
    $region5: #{tpu_custom_call.1} parent=1 // loop_body
      %s14 = ssub.s32 %s9, 1
      %s15 = ssub.s32 %s9, 2
      %s16 = sadd.s32 %s9, 1
      %s17 = ssub.s32 %s9, %s16
      %p18 = scmp.eq.s32.totalorder %s17, 0
      %s20 = sadd.s32 %s19, 1
      %s21 = scalar_select %p18, %s19, %s20
      %p24 = pneg %p18
      %p25 = scmp.eq.s32.totalorder %s9, 1
      %p26 = por %p24, %p25
      %p27 = scmp.ne.s32.totalorder %s19, %s22
      %p28 = scmp.eq.s32.totalorder %s9, 0
      %p29 = por %p27, %p28
      %p30 = scmp.ne.s32.totalorder %s19, %s22
      %p31 = scmp.eq.s32.totalorder %s14, 1
      %p32 = por %p30, %p31
      %p33 = scmp.ne.s32.totalorder %s22, %s23
      %p34 = scmp.eq.s32.totalorder %s14, 0
      %p35 = por %p33, %p34
      %p36 = scmp.ne.s32.totalorder %s22, %s23
      %p37 = scmp.eq.s32.totalorder %s15, 1
      %p38 = por %p36, %p37
      %p40 = scmp.ne.s32.totalorder %s23, %s39
      %p41 = scmp.eq.s32.totalorder %s15, 0
      %p42 = por %p40, %p41
      %s44 = sadd.s32 %s43, 1
      %p47 = scmp.eq.s32.totalorder %s9, 1
      %p48 = scmp.ne.s32.totalorder %s43, %s45
      %p49 = scmp.eq.s32.totalorder %s9, 0
      %p50 = por %p48, %p49
      %p51 = scmp.ne.s32.totalorder %s43, %s45
      %p52 = scmp.eq.s32.totalorder %s14, 1
      %p53 = por %p51, %p52
      %p54 = scmp.ne.s32.totalorder %s45, %s46
      %p55 = scmp.eq.s32.totalorder %s14, 0
      %p56 = por %p54, %p55
      %p57 = scmp.ne.s32.totalorder %s45, %s46
      %p58 = scmp.eq.s32.totalorder %s15, 1
      %p59 = por %p57, %p58
      %p61 = scmp.ne.s32.totalorder %s46, %s60
      %p62 = scmp.eq.s32.totalorder %s15, 0
      %p63 = por %p61, %p62
      %s64 = ssub.s32 %s9, %s16
      %p65 = scmp.eq.s32.totalorder %s64, 0
      %s67 = sadd.s32 %s66, 1
      %s68 = scalar_select %p65, %s66, %s67
      %p71 = pneg %p65
      %p72 = scmp.eq.s32.totalorder %s9, 1
      %p73 = por %p71, %p72
      %p74 = scmp.ne.s32.totalorder %s66, %s69
      %p75 = scmp.eq.s32.totalorder %s9, 0
      %p76 = por %p74, %p75
      %p77 = scmp.ne.s32.totalorder %s66, %s69
      %p78 = scmp.eq.s32.totalorder %s14, 1
      %p79 = por %p77, %p78
      %p80 = scmp.ne.s32.totalorder %s69, %s70
      %p81 = scmp.eq.s32.totalorder %s14, 0
      %p82 = por %p80, %p81
      %p83 = scmp.ne.s32.totalorder %s69, %s70
      %p84 = scmp.eq.s32.totalorder %s15, 1
      %p85 = por %p83, %p84
      %p87 = scmp.ne.s32.totalorder %s70, %s86
      %p88 = scmp.eq.s32.totalorder %s15, 0
      %p89 = por %p87, %p88
      %p90 = scmp.le.s32.totalorder 1, %s9
      %p91 = scmp.lt.s32.totalorder %s9, 3
      %p92 = pnand %p90, %p91
      %p93 = pneg %p92
      // Predicated region
      $region9: #{tpu_custom_call.1} parent=5 // pred_check
        _
      $region10: #{tpu_custom_call.1} parent=5 // pred_check_branch
        %95 = sbr.rel (%p92) target = $region12
      $region11: #{tpu_custom_call.1} parent=5 // pred_region
        %s96 = ssub.s32 %s9, 1
        // Predicated region
        $region13: #{tpu_custom_call.1} parent=11 // pred_check
          %p97 = pneg %p56
        $region14: #{tpu_custom_call.1} parent=11 // pred_check_branch
          %99 = sbr.rel (%p97) target = $region16
        $region15: #{tpu_custom_call.1} parent=11 // pred_region
          %s101 = ssub.s32 512, 512
          %102 = vsyncadd [#allocation5], %s101
          %s104 = sshll.u32 [#allocation4], 4
          %s105 = int_to_ptr.vmem [resolvable:$true] %s104
          %107 = dma.hbm_to_vmem [thread:$0]  %s1, 512, %s105, [#allocation5]
        $region16: #{tpu_custom_call.1} parent=11 // pred_fallthru
          _
      $region12: #{tpu_custom_call.1} parent=5 // pred_fallthru
        _
      %p108 = scmp.lt.s32.totalorder %s9, 2
      // Predicated region
      $region17: #{tpu_custom_call.1} parent=5 // pred_check
        %p109 = pneg %p108
      $region18: #{tpu_custom_call.1} parent=5 // pred_check_branch
        %111 = sbr.rel (%p109) target = $region20
      $region19: #{tpu_custom_call.1} parent=5 // pred_region
        // Predicated region
        $region21: #{tpu_custom_call.1} parent=19 // pred_check
          %p112 = pneg %p29
        $region22: #{tpu_custom_call.1} parent=19 // pred_check_branch
          %114 = sbr.rel (%p112) target = $region24
        $region23: #{tpu_custom_call.1} parent=19 // pred_region
          %p115 = scmp.lt.s32.totalorder %s9, 1
          %s116 = scalar_select %p115, %s9, 1
          %s117 = smul.addr %s116, 2
          %s118 = smul.addr %s117, 4
          %s119 = scalar_lea.vmem %s0, %s118
        $region24: #{tpu_custom_call.1} parent=19 // pred_fallthru
          _
      $region20: #{tpu_custom_call.1} parent=5 // pred_fallthru
        _
      %p120 = scmp.le.s32.totalorder 1, %s9
      %p121 = scmp.lt.s32.totalorder %s9, 3
      %p122 = pnand %p120, %p121
      %p123 = pneg %p122
      // Predicated region
      $region25: #{tpu_custom_call.1} parent=5 // pred_check
        _
      $region26: #{tpu_custom_call.1} parent=5 // pred_check_branch
        %125 = sbr.rel (%p122) target = $region28
      $region27: #{tpu_custom_call.1} parent=5 // pred_region
        %s126 = ssub.s32 %s9, 1
        // Predicated region
        $region29: #{tpu_custom_call.1} parent=27 // pred_check
          %p127 = pneg %p56
        $region30: #{tpu_custom_call.1} parent=27 // pred_check_branch
          %129 = sbr.rel (%p127) target = $region32
        $region31: #{tpu_custom_call.1} parent=27 // pred_region
          %130 = dma.done [#allocation5], 512
        $region32: #{tpu_custom_call.1} parent=27 // pred_fallthru
          _
        %p131 = scmp.lt.s32.totalorder %s14, 1
        %s132 = scalar_select %p131, %s14, 1
        %s133 = smul.addr %s132, 2
        %s134 = smul.addr %s133, 4
        %s135 = scalar_lea.vmem %s0, %s134
        %p136 = pneg %p35
        %p137 = pneg %p32
        %p138 = pneg %p56
        %p139 = pneg %p53
        %p140 = pneg %p82
        %p141 = pneg %p79
        %p142 = scmp.lt.s32.totalorder %s14, 1
        %s143 = scalar_select %p142, %s14, 1
        %s144 = smul.addr %s143, 8
        %s145 = smul.addr %s144, 4
        %s146 = scalar_lea.vmem %s2, %s145
        %p147 = scmp.lt.s32.totalorder %s14, 1
        %s148 = scalar_select %p147, %s14, 1
        %s149 = smul.addr %s148, 2
        %s150 = smul.addr %s149, 4
        %s151 = scalar_lea.vmem %s0, %s150
        %p152 = scmp.lt.s32.totalorder %s14, 1
        %s153 = scalar_select %p152, %s14, 1
        %s154 = smul.addr %s153, 8
        %s155 = smul.addr %s154, 4
        %s156 = scalar_lea.vmem %s2, %s155
        %v157 = vld [vmem:[#allocation4] sm:$0x77]
        %v158 = vld [vmem:[#allocation4 + $0x8] sm:$0x77]
        %v159 = vld [vmem:[#allocation4 + $0x10] sm:$0x77]
        %v160 = vld [vmem:[#allocation4 + $0x18] sm:$0x77]
        %v161 = vxor.u32 %v157, 2147483648
        %v162 = vxor.u32 %v158, 2147483648
        %v163 = vxor.u32 %v159, 2147483648
        %v164 = vxor.u32 %v160, 2147483648
        %v165 = vmul.f32 %v161, 1.442695
        %v166 = vpow.pop %v165
        %v167 = vmul.f32 %v162, 1.442695
        %v168 = vpow.pop %v167
        %v169 = vmul.f32 %v163, 1.442695
        %v170 = vpow.pop %v169
        %v171 = vmul.f32 %v164, 1.442695
        %v172 = vpow.pop %v171
        %v173 = vadd.f32 %v166, 1.0
        %v174 = vadd.f32 %v168, 1.0
        %v175 = vadd.f32 %v170, 1.0
        %v176 = vadd.f32 %v172, 1.0
        %v177 = vrcp.pop %v173
        %v178 = vmul.f32 1.0, %v177
        %v179 = vrcp.pop %v174
        %v180 = vmul.f32 1.0, %v179
        %v181 = vrcp.pop %v175
        %v182 = vmul.f32 1.0, %v181
        %v183 = vrcp.pop %v176
        %v184 = vmul.f32 1.0, %v183
        %185 = vst [vmem:[#allocation3] sm:$0xff] 1.0
        %v186 = vlaneseq
        %vm187 = vcmp.ge.s32.totalorder %v186, 8
        %vm188 = vcmp.lt.s32.totalorder %v186, 24
        %vm189 = vmand %vm187, %vm188
        %190 = vst.msk [vmem:[#allocation3 + $0x2] sm:$0x1] %vm189, 0.0
        %vm191 = vcmp.ge.s32.totalorder %v186, 40
        %vm192 = vcmp.lt.s32.totalorder %v186, 56
        %vm193 = vmand %vm191, %vm192
        %194 = vst.msk [vmem:[#allocation3 + $0x2] sm:$0x1] %vm193, 0.0
        %vm195 = vcmp.ge.s32.totalorder %v186, 72
        %vm196 = vcmp.lt.s32.totalorder %v186, 88
        %vm197 = vmand %vm195, %vm196
        %198 = vst.msk [vmem:[#allocation3 + $0x2] sm:$0x1] %vm197, 0.0
        %vm199 = vcmp.ge.s32.totalorder %v186, 104
        %vm200 = vcmp.lt.s32.totalorder %v186, 120
        %vm201 = vmand %vm199, %vm200
        %202 = vst.msk [vmem:[#allocation3 + $0x2] sm:$0x1] %vm201, 0.0
        %203 = vst.msk [vmem:[#allocation3 + $0x3] sm:$0x1] %vm189, 0.0
        %204 = vst.msk [vmem:[#allocation3 + $0x3] sm:$0x1] %vm193, 0.0
        %205 = vst.msk [vmem:[#allocation3 + $0x3] sm:$0x1] %vm197, 0.0
        %206 = vst.msk [vmem:[#allocation3 + $0x3] sm:$0x1] %vm201, 0.0
        %207 = vst.msk [vmem:[#allocation3 + $0x4] sm:$0x1] %vm189, 0.0
        %208 = vst.msk [vmem:[#allocation3 + $0x4] sm:$0x1] %vm193, 0.0
        %209 = vst.msk [vmem:[#allocation3 + $0x4] sm:$0x1] %vm197, 0.0
        %210 = vst.msk [vmem:[#allocation3 + $0x4] sm:$0x1] %vm201, 0.0
        %211 = vst.msk [vmem:[#allocation3 + $0x5] sm:$0x1] %vm189, 0.0
        %212 = vst.msk [vmem:[#allocation3 + $0x5] sm:$0x1] %vm193, 0.0
        %213 = vst.msk [vmem:[#allocation3 + $0x5] sm:$0x1] %vm197, 0.0
        %214 = vst.msk [vmem:[#allocation3 + $0x5] sm:$0x1] %vm201, 0.0
        %v215 = vld [vmem:[#allocation3] sm:$0xff]
        %v217 = vlaneseq
        %v218 = vshrl.u32 %v217, 7
        %v219 = vsub.s32 0, %v218
        %v220 = vrot.slane %v215, %v219
        %v221 = vlaneseq
        %v222 = vshrl.u32 %v221, 7
        %v223 = vsub.s32 1, %v222
        %v224 = vrot.slane %v215, %v223
        %v225 = vlaneseq
        %v226 = vshrl.u32 %v225, 7
        %v227 = vsub.s32 2, %v226
        %v228 = vrot.slane %v215, %v227
        %v229 = vlaneseq
        %v230 = vshrl.u32 %v229, 7
        %v231 = vsub.s32 3, %v230
        %v232 = vrot.slane %v215, %v231
        %v233 = vlaneseq
        %v234 = vshrl.u32 %v233, 7
        %v235 = vsub.s32 4, %v234
        %v236 = vrot.slane %v215, %v235
        %v237 = vlaneseq
        %v238 = vshrl.u32 %v237, 7
        %v239 = vsub.s32 5, %v238
        %v240 = vrot.slane %v215, %v239
        %v241 = vlaneseq
        %v242 = vshrl.u32 %v241, 7
        %v243 = vsub.s32 6, %v242
        %v244 = vrot.slane %v215, %v243
        %v245 = vlaneseq
        %v246 = vshrl.u32 %v245, 7
        %v247 = vsub.s32 7, %v246
        %v248 = vrot.slane %v215, %v247
        %v249 = vcombine.low %v220, %v224
        %v250 = vcombine.low %v228, %v232
        %v251 = vcombine.low %v236, %v240
        %v252 = vcombine.low %v244, %v248
        %v257 = vmul.f32 %v178, %v249
        %v258 = vmul.f32 %v180, %v250
        %v259 = vmul.f32 %v182, %v251
        %v260 = vmul.f32 %v184, %v252
        %261 = vst [vmem:[#allocation2] sm:$0x77] 0.0
        %262 = vst [vmem:[#allocation2 + $0x8] sm:$0x77] 0.0
        %263 = vst [vmem:[#allocation2 + $0x10] sm:$0x77] 0.0
        %264 = vst [vmem:[#allocation2 + $0x18] sm:$0x77] 0.0
        %v265 = vld [vmem:[%s151] sm:$0x77]
        %267 = vrot.lane.b32.xlu0 %v265, 8
        %v268 = vpop.permute.xlu0 %267
        %vm270 = vcmask 190528
        %271 = vst.msk [vmem:[#allocation2 + $0x8] sm:$0x7] %vm270, %v268
        %272 = vrot.lane.b32.xlu0 %v265, 24
        %v273 = vpop.permute.xlu0 %272
        %vm275 = vcmask 452928
        %276 = vst.msk [vmem:[#allocation2 + $0x8] sm:$0x7] %vm275, %v273
        %277 = vrot.lane.b32.xlu0 %v265, 40
        %v278 = vpop.permute.xlu0 %277
        %vm280 = vcmask 715328
        %281 = vst.msk [vmem:[#allocation2 + $0x8] sm:$0x7] %vm280, %v278
        %282 = vrot.lane.b32.xlu0 %v265, 56
        %v283 = vpop.permute.xlu0 %282
        %vm285 = vcmask 977728
        %286 = vst.msk [vmem:[#allocation2 + $0x8] sm:$0x7] %vm285, %v283
        %287 = vrot.lane.b32.xlu0 %v265, 72
        %v288 = vpop.permute.xlu0 %287
        %290 = vst.msk [vmem:[#allocation2 + $0xc] sm:$0x7] %vm270, %v288
        %291 = vrot.lane.b32.xlu0 %v265, 88
        %v292 = vpop.permute.xlu0 %291
        %294 = vst.msk [vmem:[#allocation2 + $0xc] sm:$0x7] %vm275, %v292
        %295 = vrot.lane.b32.xlu0 %v265, 104
        %v296 = vpop.permute.xlu0 %295
        %298 = vst.msk [vmem:[#allocation2 + $0xc] sm:$0x7] %vm280, %v296
        %299 = vrot.lane.b32.xlu0 %v265, 120
        %v300 = vpop.permute.xlu0 %299
        %302 = vst.msk [vmem:[#allocation2 + $0xc] sm:$0x7] %vm285, %v300
        %v303 = vrot.slane %v268, 4
        %vm304 = vcmask 64512
        %v305 = vsel %vm304, %v268, %v303
        %307 = vst.msk [vmem:[#allocation2 + $0x10] sm:$0x7] %vm270, %v305
        %v308 = vrot.slane %v273, 4
        %vm309 = vcmask 195584
        %v310 = vsel %vm309, %v273, %v308
        %312 = vst.msk [vmem:[#allocation2 + $0x10] sm:$0x7] %vm275, %v310
        %v313 = vrot.slane %v278, 4
        %vm314 = vcmask 326656
        %v315 = vsel %vm314, %v278, %v313
        %317 = vst.msk [vmem:[#allocation2 + $0x10] sm:$0x7] %vm280, %v315
        %v318 = vrot.slane %v283, 4
        %vm319 = vcmask 457728
        %v320 = vsel %vm319, %v283, %v318
        %322 = vst.msk [vmem:[#allocation2 + $0x10] sm:$0x7] %vm285, %v320
        %v323 = vrot.slane %v288, 4
        %325 = vst.msk [vmem:[#allocation2 + $0x14] sm:$0x7] %vm270, %v323
        %v326 = vrot.slane %v292, 4
        %328 = vst.msk [vmem:[#allocation2 + $0x14] sm:$0x7] %vm275, %v326
        %v329 = vrot.slane %v296, 4
        %331 = vst.msk [vmem:[#allocation2 + $0x14] sm:$0x7] %vm280, %v329
        %v332 = vrot.slane %v300, 4
        %334 = vst.msk [vmem:[#allocation2 + $0x14] sm:$0x7] %vm285, %v332
        %v335 = vld [vmem:[#allocation2] sm:$0x77]
        %v336 = vld [vmem:[#allocation2 + $0x8] sm:$0x77]
        %v337 = vld [vmem:[#allocation2 + $0x10] sm:$0x77]
        %v338 = vld [vmem:[#allocation2 + $0x18] sm:$0x77]
        %v339 = vadd.f32 %v335, %v257
        %v340 = vadd.f32 %v336, %v258
        %v341 = vadd.f32 %v337, %v259
        %v342 = vadd.f32 %v338, %v260
        %343 = vst [vmem:[%s156] sm:$0x77] %v339
        %344 = vst [vmem:[%s156 + $0x8] sm:$0x77] %v340
        %345 = vst [vmem:[%s156 + $0x10] sm:$0x77] %v341
        %346 = vst [vmem:[%s156 + $0x18] sm:$0x77] %v342
        %p347 = scmp.lt.s32.totalorder %s14, 1
        %s348 = scalar_select %p347, %s14, 1
        %s349 = smul.addr %s348, 8
        %s350 = smul.addr %s349, 4
        %s351 = scalar_lea.vmem %s2, %s350
        // Predicated region
        $region33: #{tpu_custom_call.1} parent=27 // pred_check
          %p352 = pneg %p79
        $region34: #{tpu_custom_call.1} parent=27 // pred_check_branch
          %354 = sbr.rel (%p352) target = $region36
        $region35: #{tpu_custom_call.1} parent=27 // pred_region
          _
        $region36: #{tpu_custom_call.1} parent=27 // pred_fallthru
          _
      $region28: #{tpu_custom_call.1} parent=5 // pred_fallthru
        _
      %p355 = scmp.le.s32.totalorder 2, %s9
      // Predicated region
      $region37: #{tpu_custom_call.1} parent=5 // pred_check
        %p356 = pneg %p355
      $region38: #{tpu_custom_call.1} parent=5 // pred_check_branch
        %358 = sbr.rel (%p356) target = $region40
      $region39: #{tpu_custom_call.1} parent=5 // pred_region
        %s359 = ssub.s32 %s9, 2
        // Predicated region
        $region41: #{tpu_custom_call.1} parent=39 // pred_check
          %p360 = pneg %p85
        $region42: #{tpu_custom_call.1} parent=39 // pred_check_branch
          %362 = sbr.rel (%p360) target = $region44
        $region43: #{tpu_custom_call.1} parent=39 // pred_region
          %p363 = scmp.lt.s32.totalorder %s15, 1
          %s364 = scalar_select %p363, %s15, 1
          %s365 = smul.addr %s364, 8
          %s366 = smul.addr %s365, 4
          %s367 = scalar_lea.vmem %s2, %s366
        $region44: #{tpu_custom_call.1} parent=39 // pred_fallthru
          _
      $region40: #{tpu_custom_call.1} parent=5 // pred_fallthru
        _
    $region6: #{tpu_custom_call.1} parent=1 // loop_footer
      %s13 = sadd.s32 1, %s9
    $region7: #{tpu_custom_call.1} parent=1 // loop_footer_branch
      %8 = sbr.rel target = $region3
    $region8: #{tpu_custom_call.1} parent=1 // loop_exit
      _
    %368 = vsyncpa [#allocation5], 1
    %s369 = scalar_lea.sflag [#allocation5], 1
    %370 = vsyncpa %s369, 1

</llo_original>
